<compile_context>
chip_gen: v5e
topology: v5e:2x2
jax: 0.10.0
libtpu: 0.0.40
codegen_flags: <defaults>
</compile_context>

<pallas_src>
import functools
import math

import jax
import jax.numpy as jnp
from jax.experimental import pallas as pl
from jax.experimental.pallas import tpu as pltpu


def _mlp_kernel(x_ref,
                w1_ref, b1_ref,
                w2_ref, b2_ref,
                w3_ref, b3_ref,
                w4_ref, b4_ref,
                out_ref):
    # MXU matmuls: bf16 operands, f32 accumulation. Elementwise (bias + ReLU)
    # stays in f32 (v5e-friendly); activations cast back to bf16 only when fed
    # to the next matmul.
    h = jnp.dot(x_ref[...], w1_ref[...], preferred_element_type=jnp.float32)
    h = jnp.maximum(h + b1_ref[...], 0.0).astype(jnp.bfloat16)

    h = jnp.dot(h, w2_ref[...], preferred_element_type=jnp.float32)
    h = jnp.maximum(h + b2_ref[...], 0.0).astype(jnp.bfloat16)

    h = jnp.dot(h, w3_ref[...], preferred_element_type=jnp.float32)
    h = jnp.maximum(h + b3_ref[...], 0.0).astype(jnp.bfloat16)

    h = jnp.dot(h, w4_ref[...], preferred_element_type=jnp.float32)
    out_ref[...] = (h + b4_ref[...]).astype(out_ref.dtype)


@functools.partial(jax.jit, static_argnames=("tile_b",))
def net_fc_forward(x, params, *, tile_b=1024):
    """x: (B, n_in) float32.  params: list of (W:(in,out) f32, b:(1,out) f32)."""
    B, n_in = x.shape
    (w1, b1), (w2, b2), (w3, b3), (w4, b4) = params
    n_out = w4.shape[1]

    # ---- batch tiling (sublane multiple of 8) -------------------------------
    b_up = max(8, pl.cdiv(B, 8) * 8)
    tile_b = max(8, (int(min(tile_b, b_up)) // 8) * 8)
    # v7x: guarantee >=2 grid steps (when the batch permits) so the "parallel"
    # axis can actually shard across both TensorCores.
    if b_up >= 16 and pl.cdiv(b_up, tile_b) < 2:
        tile_b = max(8, (pl.cdiv(b_up, 2) // 8) * 8)
    b_pad = pl.cdiv(b_up, tile_b) * tile_b

    # ---- operand preparation: bf16 matmul operands, f32 biases --------------
    xb = x.astype(jnp.bfloat16)
    if b_pad != B:
        xb = jnp.zeros((b_pad, n_in), jnp.bfloat16).at[:B].set(xb)

    w1b = w1.astype(jnp.bfloat16)
    w2b = w2.astype(jnp.bfloat16)
    w3b = w3.astype(jnp.bfloat16)
    w4b = w4.astype(jnp.bfloat16)
    b1f = b1.astype(jnp.float32)
    b2f = b2.astype(jnp.float32)
    b3f = b3.astype(jnp.float32)
    b4f = b4.astype(jnp.float32)

    grid = (b_pad // tile_b,)

    def _const(i):
        return (0, 0)

    in_specs = [
        pl.BlockSpec((tile_b, n_in), lambda i: (i, 0)),      # x: streamed over batch
        pl.BlockSpec(w1b.shape, _const), pl.BlockSpec(b1f.shape, _const),
        pl.BlockSpec(w2b.shape, _const), pl.BlockSpec(b2f.shape, _const),
        pl.BlockSpec(w3b.shape, _const), pl.BlockSpec(b3f.shape, _const),
        pl.BlockSpec(w4b.shape, _const), pl.BlockSpec(b4f.shape, _const),
    ]
    # Narrow output block: last dim 2 equals the full array dim (legal); no
    # padded lanes are ever written to HBM.
    out_specs = pl.BlockSpec((tile_b, n_out), lambda i: (i, 0))

    flops = 2 * b_pad * (n_in * 128 + 128 * 128 + 128 * 64 + 64 * n_out)
    bytes_accessed = (
        xb.size * 2 + b_pad * n_out * 4 +
        (w1b.size + w2b.size + w3b.size + w4b.size) * 2 +
        (b1f.size + b2f.size + b3f.size + b4f.size) * 4)

    out = pl.pallas_call(
        _mlp_kernel,
        out_shape=jax.ShapeDtypeStruct((b_pad, n_out), jnp.float32),
        grid=grid,
        in_specs=in_specs,
        out_specs=out_specs,
        compiler_params=pltpu.CompilerParams(
            dimension_semantics=("parallel",)),
        cost_estimate=pl.CostEstimate(
            flops=flops, bytes_accessed=bytes_accessed, transcendentals=0),
    )(xb, w1b, b1f, w2b, b2f, w3b, b3f, w4b, b4f)

    return out[:B]


def init_params(key, n_in):
    """Deterministic PyTorch-style Linear init: U(-1/sqrt(fan_in), 1/sqrt(fan_in))."""
    dims = [(n_in, 128), (128, 128), (128, 64), (64, 2)]
    params = []
    for (fan_in, fan_out) in dims:
        key, kw, kb = jax.random.split(key, 3)
        bound = 1.0 / math.sqrt(fan_in)
        w = jax.random.uniform(kw, (fan_in, fan_out), jnp.float32, -bound, bound)
        b = jax.random.uniform(kb, (1, fan_out), jnp.float32, -bound, bound)
        params.append((w, b))
    return params


if __name__ == "__main__":
    key = jax.random.PRNGKey(0)
    n_in = 32
    batch = 2

    key, kx = jax.random.split(key)
    x = jax.random.normal(kx, (batch, n_in), dtype=jnp.float32)

    params = init_params(key, n_in)

    out = net_fc_forward(x, params)
    jax.block_until_ready(out)

    # reference 1: same bf16-operand / f32-accumulate math in pure JAX
    h = x.astype(jnp.bfloat16)
    for i, (w, b) in enumerate(params):
        h = jnp.dot(h, w.astype(jnp.bfloat16),
                    preferred_element_type=jnp.float32) + b
        if i < 3:
            h = jnp.maximum(h, 0.0).astype(jnp.bfloat16)
    ref_bf16 = h

    # reference 2: full f32 PyTorch-equivalent forward (looser tolerance)
    ref_f32 = x
    for i, (w, b) in enumerate(params):
        ref_f32 = ref_f32 @ w + b
        if i < 3:
            ref_f32 = jnp.maximum(ref_f32, 0.0)

    assert out.shape == (batch, 2)
    assert jnp.allclose(out, ref_bf16, atol=2e-3, rtol=1e-2), \
        float(jnp.max(jnp.abs(out - ref_bf16)))
    assert jnp.allclose(out, ref_f32, atol=5e-2, rtol=5e-2), \
        float(jnp.max(jnp.abs(out - ref_f32)))

    print("KERNEL_OK")
</pallas_src>

<mosaic_0001>
module attributes {stable_mosaic.version = 11 : i64} {
  func.func @_mlp_kernel(%arg0: i32, %arg1: memref<8x32xbf16, #tpu.memory_space<vmem>>, %arg2: memref<32x128xbf16, #tpu.memory_space<vmem>>, %arg3: memref<1x128xf32, #tpu.memory_space<vmem>>, %arg4: memref<128x128xbf16, #tpu.memory_space<vmem>>, %arg5: memref<1x128xf32, #tpu.memory_space<vmem>>, %arg6: memref<128x64xbf16, #tpu.memory_space<vmem>>, %arg7: memref<1x64xf32, #tpu.memory_space<vmem>>, %arg8: memref<64x2xbf16, #tpu.memory_space<vmem>>, %arg9: memref<1x2xf32, #tpu.memory_space<vmem>>, %arg10: memref<8x2xf32, #tpu.memory_space<vmem>>) attributes {dimension_semantics = [#tpu.dimension_semantics<parallel>], iteration_bounds = array<i64: 1>, scalar_prefetch = 0 : i64, scratch_operands = 0 : i64, tpu.core_type = #tpu.core_type<tc>, window_params = [{transform_indices = @transform_0, window_bounds = array<i64: 8, 32>}, {pipeline_mode = #tpu.pipeline_mode<synchronous>, transform_indices = @transform_1, window_bounds = array<i64: 32, 128>}, {pipeline_mode = #tpu.pipeline_mode<synchronous>, transform_indices = @transform_2, window_bounds = array<i64: 1, 128>}, {pipeline_mode = #tpu.pipeline_mode<synchronous>, transform_indices = @transform_3, window_bounds = array<i64: 128, 128>}, {pipeline_mode = #tpu.pipeline_mode<synchronous>, transform_indices = @transform_4, window_bounds = array<i64: 1, 128>}, {pipeline_mode = #tpu.pipeline_mode<synchronous>, transform_indices = @transform_5, window_bounds = array<i64: 128, 64>}, {pipeline_mode = #tpu.pipeline_mode<synchronous>, transform_indices = @transform_6, window_bounds = array<i64: 1, 64>}, {pipeline_mode = #tpu.pipeline_mode<synchronous>, transform_indices = @transform_7, window_bounds = array<i64: 64, 2>}, {pipeline_mode = #tpu.pipeline_mode<synchronous>, transform_indices = @transform_8, window_bounds = array<i64: 1, 2>}, {transform_indices = @transform_9, window_bounds = array<i64: 8, 2>}]} {
    %c0 = arith.constant 0 : index
    %c0_0 = arith.constant 0 : index
    %0 = vector.load %arg1[%c0, %c0_0] : memref<8x32xbf16, #tpu.memory_space<vmem>>, vector<8x32xbf16>
    %c0_1 = arith.constant 0 : index
    %c0_2 = arith.constant 0 : index
    %1 = vector.load %arg2[%c0_1, %c0_2] : memref<32x128xbf16, #tpu.memory_space<vmem>>, vector<32x128xbf16>
    %cst = arith.constant dense<0.000000e+00> : vector<8x128xf32>
    %2 = tpu.matmul %0, %1, %cst {dimension_numbers = #tpu.dot_dimension_numbers<[1], [0], [0], [1], [0, 0, 1, 1], [], []>} : vector<8x32xbf16>, vector<32x128xbf16>, vector<8x128xf32> -> vector<8x128xf32>
    %c0_3 = arith.constant 0 : index
    %c0_4 = arith.constant 0 : index
    %3 = vector.load %arg3[%c0_3, %c0_4] : memref<1x128xf32, #tpu.memory_space<vmem>>, vector<1x128xf32>
    %4 = vector.broadcast %3 : vector<1x128xf32> to vector<8x128xf32>
    %5 = arith.addf %2, %4 : vector<8x128xf32>
    %cst_5 = arith.constant 0.000000e+00 : f32
    %6 = vector.broadcast %cst_5 : f32 to vector<8x128xf32>
    %7 = arith.maximumf %5, %6 : vector<8x128xf32>
    %8 = arith.truncf %7 : vector<8x128xf32> to vector<8x128xbf16>
    %c0_6 = arith.constant 0 : index
    %c0_7 = arith.constant 0 : index
    %9 = vector.load %arg4[%c0_6, %c0_7] : memref<128x128xbf16, #tpu.memory_space<vmem>>, vector<128x128xbf16>
    %cst_8 = arith.constant dense<0.000000e+00> : vector<8x128xf32>
    %10 = tpu.matmul %8, %9, %cst_8 {dimension_numbers = #tpu.dot_dimension_numbers<[1], [0], [0], [1], [0, 0, 1, 1], [], []>} : vector<8x128xbf16>, vector<128x128xbf16>, vector<8x128xf32> -> vector<8x128xf32>
    %c0_9 = arith.constant 0 : index
    %c0_10 = arith.constant 0 : index
    %11 = vector.load %arg5[%c0_9, %c0_10] : memref<1x128xf32, #tpu.memory_space<vmem>>, vector<1x128xf32>
    %12 = vector.broadcast %11 : vector<1x128xf32> to vector<8x128xf32>
    %13 = arith.addf %10, %12 : vector<8x128xf32>
    %cst_11 = arith.constant 0.000000e+00 : f32
    %14 = vector.broadcast %cst_11 : f32 to vector<8x128xf32>
    %15 = arith.maximumf %13, %14 : vector<8x128xf32>
    %16 = arith.truncf %15 : vector<8x128xf32> to vector<8x128xbf16>
    %c0_12 = arith.constant 0 : index
    %c0_13 = arith.constant 0 : index
    %17 = vector.load %arg6[%c0_12, %c0_13] : memref<128x64xbf16, #tpu.memory_space<vmem>>, vector<128x64xbf16>
    %cst_14 = arith.constant dense<0.000000e+00> : vector<8x64xf32>
    %18 = tpu.matmul %16, %17, %cst_14 {dimension_numbers = #tpu.dot_dimension_numbers<[1], [0], [0], [1], [0, 0, 1, 1], [], []>} : vector<8x128xbf16>, vector<128x64xbf16>, vector<8x64xf32> -> vector<8x64xf32>
    %c0_15 = arith.constant 0 : index
    %c0_16 = arith.constant 0 : index
    %19 = vector.load %arg7[%c0_15, %c0_16] : memref<1x64xf32, #tpu.memory_space<vmem>>, vector<1x64xf32>
    %20 = vector.broadcast %19 : vector<1x64xf32> to vector<8x64xf32>
    %21 = arith.addf %18, %20 : vector<8x64xf32>
    %cst_17 = arith.constant 0.000000e+00 : f32
    %22 = vector.broadcast %cst_17 : f32 to vector<8x64xf32>
    %23 = arith.maximumf %21, %22 : vector<8x64xf32>
    %24 = arith.truncf %23 : vector<8x64xf32> to vector<8x64xbf16>
    %c0_18 = arith.constant 0 : index
    %c0_19 = arith.constant 0 : index
    %25 = vector.load %arg8[%c0_18, %c0_19] : memref<64x2xbf16, #tpu.memory_space<vmem>>, vector<64x2xbf16>
    %cst_20 = arith.constant dense<0.000000e+00> : vector<8x2xf32>
    %26 = tpu.matmul %24, %25, %cst_20 {dimension_numbers = #tpu.dot_dimension_numbers<[1], [0], [0], [1], [0, 0, 1, 1], [], []>} : vector<8x64xbf16>, vector<64x2xbf16>, vector<8x2xf32> -> vector<8x2xf32>
    %c0_21 = arith.constant 0 : index
    %c0_22 = arith.constant 0 : index
    %27 = vector.load %arg9[%c0_21, %c0_22] : memref<1x2xf32, #tpu.memory_space<vmem>>, vector<1x2xf32>
    %28 = vector.broadcast %27 : vector<1x2xf32> to vector<8x2xf32>
    %29 = arith.addf %26, %28 : vector<8x2xf32>
    %c0_23 = arith.constant 0 : index
    %c0_24 = arith.constant 0 : index
    %30 = vector.load %arg10[%c0_23, %c0_24] : memref<8x2xf32, #tpu.memory_space<vmem>>, vector<8x2xf32>
    tpu.vector_store %arg10[%c0_23, %c0_24], %29 {strides = array<i32>} : memref<8x2xf32, #tpu.memory_space<vmem>>, vector<8x2xf32>,
    return
  }
  func.func @transform_0(%arg0: i32) -> (i32, i32) {
    %c0_i32 = arith.constant 0 : i32
    %c0_i32_0 = arith.constant 0 : i32
    return %arg0, %c0_i32 : i32, i32
  }
  func.func @transform_1(%arg0: i32) -> (i32, i32) {
    %c0_i32 = arith.constant 0 : i32
    %c0_i32_0 = arith.constant 0 : i32
    %c0_i32_1 = arith.constant 0 : i32
    return %c0_i32, %c0_i32_0 : i32, i32
  }
  func.func @transform_2(%arg0: i32) -> (i32, i32) {
    %c0_i32 = arith.constant 0 : i32
    %c0_i32_0 = arith.constant 0 : i32
    %c0_i32_1 = arith.constant 0 : i32
    return %c0_i32, %c0_i32_0 : i32, i32
  }
  func.func @transform_3(%arg0: i32) -> (i32, i32) {
    %c0_i32 = arith.constant 0 : i32
    %c0_i32_0 = arith.constant 0 : i32
    %c0_i32_1 = arith.constant 0 : i32
    return %c0_i32, %c0_i32_0 : i32, i32
  }
  func.func @transform_4(%arg0: i32) -> (i32, i32) {
    %c0_i32 = arith.constant 0 : i32
    %c0_i32_0 = arith.constant 0 : i32
    %c0_i32_1 = arith.constant 0 : i32
    return %c0_i32, %c0_i32_0 : i32, i32
  }
  func.func @transform_5(%arg0: i32) -> (i32, i32) {
    %c0_i32 = arith.constant 0 : i32
    %c0_i32_0 = arith.constant 0 : i32
    %c0_i32_1 = arith.constant 0 : i32
    return %c0_i32, %c0_i32_0 : i32, i32
  }
  func.func @transform_6(%arg0: i32) -> (i32, i32) {
    %c0_i32 = arith.constant 0 : i32
    %c0_i32_0 = arith.constant 0 : i32
    %c0_i32_1 = arith.constant 0 : i32
    return %c0_i32, %c0_i32_0 : i32, i32
  }
  func.func @transform_7(%arg0: i32) -> (i32, i32) {
    %c0_i32 = arith.constant 0 : i32
    %c0_i32_0 = arith.constant 0 : i32
    %c0_i32_1 = arith.constant 0 : i32
    return %c0_i32, %c0_i32_0 : i32, i32
  }
  func.func @transform_8(%arg0: i32) -> (i32, i32) {
    %c0_i32 = arith.constant 0 : i32
    %c0_i32_0 = arith.constant 0 : i32
    %c0_i32_1 = arith.constant 0 : i32
    return %c0_i32, %c0_i32_0 : i32, i32
  }
  func.func @transform_9(%arg0: i32) -> (i32, i32) {
    %c0_i32 = arith.constant 0 : i32
    %c0_i32_0 = arith.constant 0 : i32
    return %arg0, %c0_i32 : i32, i32
  }
}

</mosaic_0001>

<llo_original>
// kernel: net_fc_forward.1
$region0: #{net_fc_forward.1}
  #allocation0 [shape = 'u32[]', space=smem, size = 0x4, offset = 0x4, fixed_abs, tag = 'smem constant byte address 0x4 - core index']
  #allocation1 [shape = 'u32[72,128]{1,0:T(1,128)}', space=vmem, size = 0x9000, scoped, tag = 'internal scratch']
  %s0 = inlined_call_operand.vmem [shape: bf16[8,32], index: 0, kind: input, shape index: {}]
  %s1 = inlined_call_operand.vmem [shape: bf16[32,128], index: 1, kind: input, shape index: {}]
  %s2 = inlined_call_operand.vmem [shape: f32[1,128], index: 2, kind: input, shape index: {}]
  %s3 = inlined_call_operand.vmem [shape: bf16[128,128], index: 3, kind: input, shape index: {}]
  %s4 = inlined_call_operand.vmem [shape: f32[1,128], index: 4, kind: input, shape index: {}]
  %s5 = inlined_call_operand.vmem [shape: bf16[128,64], index: 5, kind: input, shape index: {}]
  %s6 = inlined_call_operand.vmem [shape: f32[1,64], index: 6, kind: input, shape index: {}]
  %s7 = inlined_call_operand.vmem [shape: bf16[64,2], index: 7, kind: input, shape index: {}]
  %s8 = inlined_call_operand.vmem [shape: f32[1,2], index: 8, kind: input, shape index: {}]
  %s9 = inlined_call_operand.vmem [shape: f32[8,2], index: 9, kind: output, shape index: {}]
  %s10 = sld [smem:[#allocation0]]
  $region46: #{net_fc_forward.1} parent=0
    _
  %s12 = ssub.s32 1, %s10
  %s13 = scalar_select 0, %s12, %s10
  // Predicated region
  $region2: #{net_fc_forward.1} parent=0 // pred_check
    _
  $region3: #{net_fc_forward.1} parent=0 // pred_check_branch
    %15 = sbr.rel (0) target = $region5
  $region4: #{net_fc_forward.1} parent=0 // pred_region
    _
  $region5: #{net_fc_forward.1} parent=0 // pred_fallthru
    _
  // Predicated region
  $region6: #{net_fc_forward.1} parent=0 // pred_check
    _
  $region7: #{net_fc_forward.1} parent=0 // pred_check_branch
    %17 = sbr.rel (0) target = $region9
  $region8: #{net_fc_forward.1} parent=0 // pred_region
    _
  $region9: #{net_fc_forward.1} parent=0 // pred_fallthru
    _
  // Predicated region
  $region10: #{net_fc_forward.1} parent=0 // pred_check
    _
  $region11: #{net_fc_forward.1} parent=0 // pred_check_branch
    %19 = sbr.rel (0) target = $region13
  $region12: #{net_fc_forward.1} parent=0 // pred_region
    _
  $region13: #{net_fc_forward.1} parent=0 // pred_fallthru
    _
  // Predicated region
  $region14: #{net_fc_forward.1} parent=0 // pred_check
    _
  $region15: #{net_fc_forward.1} parent=0 // pred_check_branch
    %21 = sbr.rel (0) target = $region17
  $region16: #{net_fc_forward.1} parent=0 // pred_region
    _
  $region17: #{net_fc_forward.1} parent=0 // pred_fallthru
    _
  // Predicated region
  $region18: #{net_fc_forward.1} parent=0 // pred_check
    _
  $region19: #{net_fc_forward.1} parent=0 // pred_check_branch
    %23 = sbr.rel (0) target = $region21
  $region20: #{net_fc_forward.1} parent=0 // pred_region
    _
  $region21: #{net_fc_forward.1} parent=0 // pred_fallthru
    _
  // Predicated region
  $region22: #{net_fc_forward.1} parent=0 // pred_check
    _
  $region23: #{net_fc_forward.1} parent=0 // pred_check_branch
    %25 = sbr.rel (0) target = $region25
  $region24: #{net_fc_forward.1} parent=0 // pred_region
    _
  $region25: #{net_fc_forward.1} parent=0 // pred_fallthru
    _
  // Predicated region
  $region26: #{net_fc_forward.1} parent=0 // pred_check
    _
  $region27: #{net_fc_forward.1} parent=0 // pred_check_branch
    %27 = sbr.rel (0) target = $region29
  $region28: #{net_fc_forward.1} parent=0 // pred_region
    _
  $region29: #{net_fc_forward.1} parent=0 // pred_fallthru
    _
  // Predicated region
  $region30: #{net_fc_forward.1} parent=0 // pred_check
    _
  $region31: #{net_fc_forward.1} parent=0 // pred_check_branch
    %29 = sbr.rel (0) target = $region33
  $region32: #{net_fc_forward.1} parent=0 // pred_region
    _
  $region33: #{net_fc_forward.1} parent=0 // pred_fallthru
    _
  // Predicated region
  $region34: #{net_fc_forward.1} parent=0 // pred_check
    _
  $region35: #{net_fc_forward.1} parent=0 // pred_check_branch
    %31 = sbr.rel (0) target = $region37
  $region36: #{net_fc_forward.1} parent=0 // pred_region
    _
  $region37: #{net_fc_forward.1} parent=0 // pred_fallthru
    _
  %v33 = vld [vmem:[%s0] sm:$0xf]
  %v34 = vld [vmem:[%s1] sm:$0xf]
  %v35 = vld [vmem:[%s1 + $0x4] sm:$0xf]
  %v36 = vld [vmem:[%s1 + $0x8] sm:$0xf]
  %v37 = vld [vmem:[%s1 + $0xc] sm:$0xf]
  %v38 = vld [vmem:[%s2] sm:$0x1]
  %v40 = vperm.slane %v38, 0
  %v46 = vunpack.c.l.b16 %v34
  %v47 = vunpack.c.l.b16 %v35
  %v48 = vunpack.c.l.b16 %v36
  %v49 = vunpack.c.l.b16 %v37
  %v50 = vpack.c.b16 %v47, %v46
  %v51 = vpack.c.b16 %v49, %v48
  %vm54 = vcmask 261120
  %v56 = vsel %vm54, %v33, 0
  %58 = vmatpush.bf16.msra.mxu0 0
  %59 = vmatpush.bf16.msra.mxu0 0
  %60 = vmatpush.bf16.msra.mxu0 0
  %61 = vmatpush.bf16.msra.mxu0 0
  %62 = vmatpush.bf16.msra.mxu0 0
  %63 = vmatpush.bf16.msra.mxu0 0
  %64 = vmatpush.bf16.msra.mxu0 %v51
  %65 = vmatpush.bf16.msra.mxu0 %v50
  %66 = vmatmul.bf16.gmra.mxu0 %v56
  %v67 = vpop.f32.mrf.mxu0
  %v68 = vadd.f32 %v40, %v67
  %v69 = vpop.f32.mrf.mxu0
  %70 = vdwg.mxu0
  %v71 = vmax.f32 %v68, 0.0
  %v72 = vpack.c.bf16 %v71, %v71
  %v73 = vld [vmem:[%s3] sm:$0xf]
  %v74 = vld [vmem:[%s3 + $0x4] sm:$0xf]
  %v75 = vld [vmem:[%s3 + $0x8] sm:$0xf]
  %v76 = vld [vmem:[%s3 + $0xc] sm:$0xf]
  %v77 = vld [vmem:[%s3 + $0x10] sm:$0xf]
  %v78 = vld [vmem:[%s3 + $0x14] sm:$0xf]
  %v79 = vld [vmem:[%s3 + $0x18] sm:$0xf]
  %v80 = vld [vmem:[%s3 + $0x1c] sm:$0xf]
  %v81 = vld [vmem:[%s3 + $0x20] sm:$0xf]
  %v82 = vld [vmem:[%s3 + $0x24] sm:$0xf]
  %v83 = vld [vmem:[%s3 + $0x28] sm:$0xf]
  %v84 = vld [vmem:[%s3 + $0x2c] sm:$0xf]
  %v85 = vld [vmem:[%s3 + $0x30] sm:$0xf]
  %v86 = vld [vmem:[%s3 + $0x34] sm:$0xf]
  %v87 = vld [vmem:[%s3 + $0x38] sm:$0xf]
  %v88 = vld [vmem:[%s3 + $0x3c] sm:$0xf]
  %v89 = vld [vmem:[%s4] sm:$0x1]
  %v91 = vperm.slane %v89, 0
  %v109 = vunpack.c.l.b16 %v73
  %v110 = vunpack.c.l.b16 %v74
  %v111 = vunpack.c.l.b16 %v75
  %v112 = vunpack.c.l.b16 %v76
  %v113 = vunpack.c.l.b16 %v77
  %v114 = vunpack.c.l.b16 %v78
  %v115 = vunpack.c.l.b16 %v79
  %v116 = vunpack.c.l.b16 %v80
  %v117 = vunpack.c.l.b16 %v81
  %v118 = vunpack.c.l.b16 %v82
  %v119 = vunpack.c.l.b16 %v83
  %v120 = vunpack.c.l.b16 %v84
  %v121 = vunpack.c.l.b16 %v85
  %v122 = vunpack.c.l.b16 %v86
  %v123 = vunpack.c.l.b16 %v87
  %v124 = vunpack.c.l.b16 %v88
  %v125 = vpack.c.b16 %v110, %v109
  %v126 = vpack.c.b16 %v112, %v111
  %v127 = vpack.c.b16 %v114, %v113
  %v128 = vpack.c.b16 %v116, %v115
  %v129 = vpack.c.b16 %v118, %v117
  %v130 = vpack.c.b16 %v120, %v119
  %v131 = vpack.c.b16 %v122, %v121
  %v132 = vpack.c.b16 %v124, %v123
  %141 = vmatpush.bf16.msra.mxu0 %v132
  %142 = vmatpush.bf16.msra.mxu0 %v131
  %143 = vmatpush.bf16.msra.mxu0 %v130
  %144 = vmatpush.bf16.msra.mxu0 %v129
  %145 = vmatpush.bf16.msra.mxu0 %v128
  %146 = vmatpush.bf16.msra.mxu0 %v127
  %147 = vmatpush.bf16.msra.mxu0 %v126
  %148 = vmatpush.bf16.msra.mxu0 %v125
  %149 = vmatmul.bf16.gmra.mxu0 %v72
  %v150 = vpop.f32.mrf.mxu0
  %v151 = vadd.f32 %v91, %v150
  %v152 = vpop.f32.mrf.mxu0
  %153 = vdwg.mxu0
  %v154 = vmax.f32 %v151, 0.0
  %v155 = vpack.c.bf16 %v154, %v154
  %v156 = vld [vmem:[%s5] sm:$0xf]
  %v157 = vld [vmem:[%s5 + $0x4] sm:$0xf]
  %v158 = vld [vmem:[%s5 + $0x8] sm:$0xf]
  %v159 = vld [vmem:[%s5 + $0xc] sm:$0xf]
  %v160 = vld [vmem:[%s5 + $0x10] sm:$0xf]
  %v161 = vld [vmem:[%s5 + $0x14] sm:$0xf]
  %v162 = vld [vmem:[%s5 + $0x18] sm:$0xf]
  %v163 = vld [vmem:[%s5 + $0x1c] sm:$0xf]
  %v164 = vld [vmem:[%s5 + $0x20] sm:$0xf]
  %v165 = vld [vmem:[%s5 + $0x24] sm:$0xf]
  %v166 = vld [vmem:[%s5 + $0x28] sm:$0xf]
  %v167 = vld [vmem:[%s5 + $0x2c] sm:$0xf]
  %v168 = vld [vmem:[%s5 + $0x30] sm:$0xf]
  %v169 = vld [vmem:[%s5 + $0x34] sm:$0xf]
  %v170 = vld [vmem:[%s5 + $0x38] sm:$0xf]
  %v171 = vld [vmem:[%s5 + $0x3c] sm:$0xf]
  %v172 = vld [vmem:[%s6] sm:$0x1]
  %v174 = vperm.slane %v172, 0
  %v192 = vunpack.c.l.b16 %v156
  %v193 = vunpack.c.l.b16 %v157
  %v194 = vunpack.c.l.b16 %v158
  %v195 = vunpack.c.l.b16 %v159
  %v196 = vunpack.c.l.b16 %v160
  %v197 = vunpack.c.l.b16 %v161
  %v198 = vunpack.c.l.b16 %v162
  %v199 = vunpack.c.l.b16 %v163
  %v200 = vunpack.c.l.b16 %v164
  %v201 = vunpack.c.l.b16 %v165
  %v202 = vunpack.c.l.b16 %v166
  %v203 = vunpack.c.l.b16 %v167
  %v204 = vunpack.c.l.b16 %v168
  %v205 = vunpack.c.l.b16 %v169
  %v206 = vunpack.c.l.b16 %v170
  %v207 = vunpack.c.l.b16 %v171
  %v208 = vpack.c.b16 %v193, %v192
  %v209 = vpack.c.b16 %v195, %v194
  %v210 = vpack.c.b16 %v197, %v196
  %v211 = vpack.c.b16 %v199, %v198
  %v212 = vpack.c.b16 %v201, %v200
  %v213 = vpack.c.b16 %v203, %v202
  %v214 = vpack.c.b16 %v205, %v204
  %v215 = vpack.c.b16 %v207, %v206
  %224 = vmatpush.bf16.msra.mxu0 %v215
  %225 = vmatpush.bf16.msra.mxu0 %v214
  %226 = vmatpush.bf16.msra.mxu0 %v213
  %227 = vmatpush.bf16.msra.mxu0 %v212
  %228 = vmatpush.bf16.msra.mxu0 %v211
  %229 = vmatpush.bf16.msra.mxu0 %v210
  %230 = vmatpush.bf16.msra.mxu0 %v209
  %231 = vmatpush.bf16.msra.mxu0 %v208
  %232 = vmatmul.bf16.gmra.mxu0 %v155
  %v233 = vpop.f32.mrf.mxu0
  %v234 = vadd.f32 %v174, %v233
  %v235 = vpop.f32.mrf.mxu0
  %236 = vdwg.mxu0
  %v237 = vmax.f32 %v234, 0.0
  %v238 = vpack.c.bf16 %v237, %v237
  %v239 = vld [vmem:[%s7] sm:$0xf]
  %v240 = vld [vmem:[%s7 + $0x4] sm:$0xf]
  %v241 = vld [vmem:[%s7 + $0x8] sm:$0xf]
  %v242 = vld [vmem:[%s7 + $0xc] sm:$0xf]
  %v243 = vld [vmem:[%s7 + $0x10] sm:$0xf]
  %v244 = vld [vmem:[%s7 + $0x14] sm:$0xf]
  %v245 = vld [vmem:[%s7 + $0x18] sm:$0xf]
  %v246 = vld [vmem:[%s7 + $0x1c] sm:$0xf]
  %v247 = vld [vmem:[%s8] sm:$0x1]
  %v249 = vperm.slane %v247, 0
  %v259 = vunpack.c.l.b16 %v239
  %v260 = vunpack.c.l.b16 %v240
  %v261 = vunpack.c.l.b16 %v241
  %v262 = vunpack.c.l.b16 %v242
  %v263 = vunpack.c.l.b16 %v243
  %v264 = vunpack.c.l.b16 %v244
  %v265 = vunpack.c.l.b16 %v245
  %v266 = vunpack.c.l.b16 %v246
  %v267 = vpack.c.b16 %v260, %v259
  %v268 = vpack.c.b16 %v262, %v261
  %v269 = vpack.c.b16 %v264, %v263
  %v270 = vpack.c.b16 %v266, %v265
  %vm275 = vcmask 523264
  %v277 = vsel %vm275, %v238, 0
  %279 = vmatpush.bf16.msra.mxu0 0
  %280 = vmatpush.bf16.msra.mxu0 0
  %281 = vmatpush.bf16.msra.mxu0 0
  %282 = vmatpush.bf16.msra.mxu0 0
  %283 = vmatpush.bf16.msra.mxu0 %v270
  %284 = vmatpush.bf16.msra.mxu0 %v269
  %285 = vmatpush.bf16.msra.mxu0 %v268
  %286 = vmatpush.bf16.msra.mxu0 %v267
  %287 = vmatmul.bf16.gmra.mxu0 %v277
  %v288 = vpop.f32.mrf.mxu0
  %v289 = vadd.f32 %v249, %v288
  %v290 = vpop.f32.mrf.mxu0
  %291 = vdwg.mxu0
  %vm292 = vcmask 15360
  %293 = vst.msk [vmem:[%s9] sm:$0xff] %vm292, %v289
  // Predicated region
  $region38: #{net_fc_forward.1} parent=0 // pred_check
    _
  $region39: #{net_fc_forward.1} parent=0 // pred_check_branch
    %295 = sbr.rel (0) target = $region41
  $region40: #{net_fc_forward.1} parent=0 // pred_region
    _
  $region41: #{net_fc_forward.1} parent=0 // pred_fallthru
    _
  // Predicated region
  $region42: #{net_fc_forward.1} parent=0 // pred_check
    _
  $region43: #{net_fc_forward.1} parent=0 // pred_check_branch
    %297 = sbr.rel (0) target = $region45
  $region44: #{net_fc_forward.1} parent=0 // pred_region
    _
  $region45: #{net_fc_forward.1} parent=0 // pred_fallthru
    _

</llo_original>
